<compile_context>
chip_gen: v5e
topology: v5e:2x2
jax: 0.10.0
libtpu: 0.0.40
codegen_flags: <defaults>
</compile_context>

<pallas_src>
import functools
import math

import jax
import jax.numpy as jnp
from jax.experimental import pallas as pl
from jax.experimental.pallas import tpu as pltpu


# Re-derive the VMEM cap per generation (96 MiB on v5e/v6e, 48 MiB on v7x).
try:
    _VMEM_CAP = int(pltpu.get_tpu_info().vmem_capacity_bytes)
except Exception:
    _VMEM_CAP = 128 * 1024 * 1024
_VMEM_LIMIT = (_VMEM_CAP * 3) // 4
_BIG_VMEM = _VMEM_CAP >= 100 * 1024 * 1024      # v5e / v6e (128 MiB physical)


def _compiler_params(dims):
    return pltpu.CompilerParams(dimension_semantics=dims,
                                vmem_limit_bytes=_VMEM_LIMIT)


# --------------------------------------------------------------------------
# Kernel A: LN1 + QKV projection (three D x D matmuls)   grid: (batch, seq-tile)
# --------------------------------------------------------------------------
def _ln_qkv_kernel(x_ref, ln1_ref, wq_ref, wk_ref, wv_ref, q_ref, k_ref, v_ref):
    x = x_ref[0]                                            # (ts, D) f32
    mu = jnp.mean(x, axis=-1, keepdims=True)
    var = jnp.mean(jnp.square(x - mu), axis=-1, keepdims=True)
    h = ((x - mu) * jax.lax.rsqrt(var + 1e-5) * ln1_ref[...]).astype(jnp.bfloat16)

    # Three separate matmuls: the live f32 intermediate is (ts, D), not (ts, 3D).
    q_ref[0] = jnp.dot(h, wq_ref[...],
                       preferred_element_type=jnp.float32).astype(jnp.bfloat16)
    k_ref[0] = jnp.dot(h, wk_ref[...],
                       preferred_element_type=jnp.float32).astype(jnp.bfloat16)
    v_ref[0] = jnp.dot(h, wv_ref[...],
                       preferred_element_type=jnp.float32).astype(jnp.bfloat16)


# --------------------------------------------------------------------------
# Kernel B: flash attention + per-head RoPE
#           grid: (batch, head-block, q-tile, kv-tile)
# --------------------------------------------------------------------------
def _flash_attn_kernel(q_ref, k_ref, v_ref, cq_ref, sq_ref, ck_ref, sk_ref,
                       o_ref, m_sc, l_sc, acc_sc, *, causal, hb, hd):
    tq = q_ref.shape[1]
    tk = k_ref.shape[1]
    half = hd // 2
    scale = 1.0 / math.sqrt(hd)
    qi = pl.program_id(2)
    ki = pl.program_id(3)

    @pl.when(ki == 0)
    def _init():
        m_sc[...] = jnp.full(m_sc.shape, -jnp.inf, jnp.float32)
        l_sc[...] = jnp.zeros(l_sc.shape, jnp.float32)
        acc_sc[...] = jnp.zeros(acc_sc.shape, jnp.float32)

    def _rope(t, cos, sin_signed):
        # sin table already carries the rotate-half sign: sin_signed = [-sin, sin].
        rot = jnp.concatenate([t[:, half:], t[:, :half]], axis=-1)
        return t * cos + rot * sin_signed

    def _compute(masked):
        q_all = q_ref[0].astype(jnp.float32)                # (tq, hb*hd)
        k_all = k_ref[0].astype(jnp.float32)                # (tk, hb*hd)
        v_all = v_ref[0]                                    # (tk, hb*hd) bf16
        cq, sq = cq_ref[...], sq_ref[...]                   # (tq, hd)
        ck, sk = ck_ref[...], sk_ref[...]                   # (tk, hd)
        if masked:
            # Only built on diagonal tiles (ki == qi, tq == tk): local lower-tri.
            row = jax.lax.broadcasted_iota(jnp.int32, (tq, tk), 0)
            col = jax.lax.broadcasted_iota(jnp.int32, (tq, tk), 1)
            keep = row >= col
        for h in range(hb):                                  # static unroll
            lo = h * hd
            qh = _rope(q_all[:, lo:lo + hd], cq, sq).astype(jnp.bfloat16)
            kh = _rope(k_all[:, lo:lo + hd], ck, sk).astype(jnp.bfloat16)
            s = jax.lax.dot_general(qh, kh, (((1,), (1,)), ((), ())),
                                    preferred_element_type=jnp.float32) * scale
            if masked:
                s = jnp.where(keep, s, -1e30)
            m_prev = m_sc[h]
            m_new = jnp.maximum(m_prev, jnp.max(s, axis=-1, keepdims=True))
            alpha = jnp.exp(m_prev - m_new)
            p = jnp.exp(s - m_new)
            l_sc[h] = alpha * l_sc[h] + jnp.sum(p, axis=-1, keepdims=True)
            acc_sc[h] = alpha * acc_sc[h] + jnp.dot(
                p.astype(jnp.bfloat16), v_all[:, lo:lo + hd],
                preferred_element_type=jnp.float32)
            m_sc[h] = m_new

    if causal:
        # Diagonal tiles get the mask; strictly-past tiles skip it; strictly-future
        # tiles are skipped entirely (and their k/v index maps are clamped, so no DMA).
        pl.when(ki == qi)(lambda: _compute(True))
        pl.when(ki < qi)(lambda: _compute(False))
    else:
        _compute(False)

    @pl.when(ki == pl.num_programs(3) - 1)
    def _finalize():
        outs = [acc_sc[h] * pl.reciprocal(l_sc[h], approx=True) for h in range(hb)]
        # Single lane-dense store of the full (tq, hb*hd) block.
        o_ref[0] = jnp.concatenate(outs, axis=-1).astype(o_ref.dtype)


# --------------------------------------------------------------------------
# Kernel C: out-proj + residual + LN2 + MLP + residual
#           grid: (batch, seq-tile, mlp-hidden-tile), hidden streamed
# --------------------------------------------------------------------------
def _out_mlp_kernel(attn_ref, x_ref, ln2_ref, outw_ref, w1_ref, b1_ref,
                    w2_ref, b2_ref, o_ref, x1_sc, h2_sc, acc_sc):
    hi = pl.program_id(2)

    @pl.when(hi == 0)
    def _init():
        attn = attn_ref[0]                                            # (ts, D) bf16
        x1 = jnp.dot(attn, outw_ref[...],
                     preferred_element_type=jnp.float32) + x_ref[0]   # residual
        x1_sc[...] = x1
        mu = jnp.mean(x1, axis=-1, keepdims=True)
        var = jnp.mean(jnp.square(x1 - mu), axis=-1, keepdims=True)
        h2 = (x1 - mu) * jax.lax.rsqrt(var + 1e-5) * ln2_ref[...]
        h2_sc[...] = h2.astype(jnp.bfloat16)
        acc_sc[...] = jnp.zeros(acc_sc.shape, jnp.float32)

    m = jnp.dot(h2_sc[...], w1_ref[...],
                preferred_element_type=jnp.float32) + b1_ref[...]     # (ts, th)
    m = jax.nn.gelu(m, approximate=True)                              # tanh GELU
    acc_sc[...] += jnp.dot(m.astype(jnp.bfloat16), w2_ref[...],
                           preferred_element_type=jnp.float32)

    @pl.when(hi == pl.num_programs(2) - 1)
    def _finalize():
        o_ref[0] = x1_sc[...] + acc_sc[...] + b2_ref[...]


# --------------------------------------------------------------------------
# Wrapper
# --------------------------------------------------------------------------
def transformer_block(x, rotary_cos_sin, mode, params, n_heads):
    """x: (B, S, D). rotary_cos_sin: tuple of (1, S, 3, 1, head_dim) arrays."""
    if mode not in ('ar', 'diff'):
        raise ValueError(mode)
    causal = (mode == 'ar')

    B, S, D = x.shape
    H = n_heads
    hd = D // H
    half = hd // 2
    D4 = params['mlp_w1'].shape[1]

    # --- tiling (generation-adaptive) ---
    ts = min(S, 512 if _BIG_VMEM else 256)
    assert S % ts == 0, "sequence length must divide the seq tile"
    ns = S // ts
    tq = tk = min(S, 512 if _BIG_VMEM else 256)
    assert S % tq == 0
    nq = S // tq
    nkv = S // tk

    # Heads per attention block: smallest divisor of H with hb*hd % 128 == 0,
    # else fall back to all heads (block == full D, always a legal last dim).
    hb = None
    for cand in range(1, H + 1):
        if H % cand == 0 and (cand * hd) % 128 == 0:
            hb = cand
            break
    if hb is None:
        hb = H
    hbd = hb * hd
    n_hb = H // hb

    th = min(D4, 1024 if _BIG_VMEM else 512)
    assert D4 % th == 0, "mlp hidden must divide the hidden tile"
    nh_t = D4 // th

    # --- compact rotary tables (S, hd); rotate-half sign folded into sin ---
    cos_full, sin_full = rotary_cos_sin
    cos = cos_full[0, :, 0, 0, :half].astype(jnp.float32)             # (S, hd/2)
    sin = sin_full[0, :, 0, 0, :half].astype(jnp.float32)
    cos_tab = jnp.concatenate([cos, cos], axis=-1)                    # (S, hd)
    sin_tab = jnp.concatenate([-sin, sin], axis=-1)                   # (S, hd)

    ln1 = (params['ln1_ar'] if causal else params['ln1_diff']).astype(jnp.float32)
    ln2 = (params['ln2_ar'] if causal else params['ln2_diff']).astype(jnp.float32)

    # Weight thirds in the original head-major (h, d) column order (no permutation).
    W = params['qkv_w'].astype(jnp.bfloat16)
    wq, wk, wv = W[:, :D], W[:, D:2 * D], W[:, 2 * D:]
    out_w = params['out_w'].astype(jnp.bfloat16)
    w1 = params['mlp_w1'].astype(jnp.bfloat16)
    w2 = params['mlp_w2'].astype(jnp.bfloat16)
    b1 = params['mlp_b1'].astype(jnp.float32)
    b2 = params['mlp_b2'].astype(jnp.float32)

    x_f32 = x.astype(jnp.float32)

    # ---------------- Kernel A: LN1 + QKV ----------------
    bytes_a = int(4 * B * S * D + 4 * D + 3 * 2 * D * D + 3 * 2 * B * S * D)
    const_w = functools.partial(pl.BlockSpec, (D, D), lambda b, si: (0, 0),
                                pipeline_mode=pl.Buffered(1))
    q_r, k_r, v_r = pl.pallas_call(
        _ln_qkv_kernel,
        out_shape=(jax.ShapeDtypeStruct((B, S, D), jnp.bfloat16),) * 3,
        grid=(B, ns),
        in_specs=[
            pl.BlockSpec((1, ts, D), lambda b, si: (b, si, 0)),       # x
            pl.BlockSpec((1, D), lambda b, si: (0, 0)),               # ln1
            const_w(), const_w(), const_w(),                          # wq, wk, wv
        ],
        out_specs=(pl.BlockSpec((1, ts, D), lambda b, si: (b, si, 0)),) * 3,
        compiler_params=_compiler_params(("parallel", "parallel")),
        cost_estimate=pl.CostEstimate(flops=int(2 * B * S * D * 3 * D),
                                      transcendentals=int(B * S),
                                      bytes_accessed=bytes_a),
    )(x_f32, ln1, wq, wk, wv)

    # ---------------- Kernel B: flash attention (+RoPE), no transposes ----------------
    if causal:
        kv_map = lambda b, g, qi, ki: (b, jnp.minimum(ki, qi), g)
        ck_map = lambda b, g, qi, ki: (jnp.minimum(ki, qi), 0)
    else:
        kv_map = lambda b, g, qi, ki: (b, ki, g)
        ck_map = lambda b, g, qi, ki: (ki, 0)

    bytes_b = int(2 * B * S * D * (2 + 2 * nq) + 2 * 4 * S * hd)
    attn = pl.pallas_call(
        functools.partial(_flash_attn_kernel, causal=causal, hb=hb, hd=hd),
        out_shape=jax.ShapeDtypeStruct((B, S, D), jnp.bfloat16),
        grid=(B, n_hb, nq, nkv),
        in_specs=[
            pl.BlockSpec((1, tq, hbd), lambda b, g, qi, ki: (b, qi, g)),   # q
            pl.BlockSpec((1, tk, hbd), kv_map),                            # k
            pl.BlockSpec((1, tk, hbd), kv_map),                            # v
            pl.BlockSpec((tq, hd), lambda b, g, qi, ki: (qi, 0)),          # cos (q)
            pl.BlockSpec((tq, hd), lambda b, g, qi, ki: (qi, 0)),          # sin (q)
            pl.BlockSpec((tk, hd), ck_map),                                # cos (k)
            pl.BlockSpec((tk, hd), ck_map),                                # sin (k)
        ],
        out_specs=pl.BlockSpec((1, tq, hbd), lambda b, g, qi, ki: (b, qi, g)),
        scratch_shapes=[pltpu.VMEM((hb, tq, 1), jnp.float32),   # running max
                        pltpu.VMEM((hb, tq, 1), jnp.float32),   # running denom
                        pltpu.VMEM((hb, tq, hd), jnp.float32)], # output accumulator
        compiler_params=_compiler_params(
            ("parallel", "parallel", "parallel", "arbitrary")),
        cost_estimate=pl.CostEstimate(flops=int(4 * B * H * S * S * hd),
                                      transcendentals=int(B * H * S * S),
                                      bytes_accessed=bytes_b),
    )(q_r, k_r, v_r, cos_tab, sin_tab, cos_tab, sin_tab)

    # ---------------- Kernel C: out-proj + residual + LN2 + MLP ----------------
    bytes_c = int(2 * B * S * D + 4 * B * S * D + 2 * D * D + 2 * 2 * D * D4
                  + 4 * (D4 + 2 * D) + 4 * B * S * D)
    out = pl.pallas_call(
        _out_mlp_kernel,
        out_shape=jax.ShapeDtypeStruct((B, S, D), jnp.float32),
        grid=(B, ns, nh_t),
        in_specs=[
            pl.BlockSpec((1, ts, D), lambda b, si, hi: (b, si, 0)),   # attn (bf16)
            pl.BlockSpec((1, ts, D), lambda b, si, hi: (b, si, 0)),   # residual x
            pl.BlockSpec((1, D), lambda b, si, hi: (0, 0)),           # ln2
            pl.BlockSpec((D, D), lambda b, si, hi: (0, 0),
                         pipeline_mode=pl.Buffered(1)),               # out_w (single-buffer)
            pl.BlockSpec((D, th), lambda b, si, hi: (0, hi)),         # w1 tile
            pl.BlockSpec((1, th), lambda b, si, hi: (0, hi)),         # b1 tile
            pl.BlockSpec((th, D), lambda b, si, hi: (hi, 0)),         # w2 tile
            pl.BlockSpec((1, D), lambda b, si, hi: (0, 0)),           # b2
        ],
        out_specs=pl.BlockSpec((1, ts, D), lambda b, si, hi: (b, si, 0)),
        scratch_shapes=[pltpu.VMEM((ts, D), jnp.float32),     # x1 (post-attn residual)
                        pltpu.VMEM((ts, D), jnp.bfloat16),    # LN2 activations
                        pltpu.VMEM((ts, D), jnp.float32)],    # MLP accumulator
        compiler_params=_compiler_params(("parallel", "parallel", "arbitrary")),
        cost_estimate=pl.CostEstimate(
            flops=int(2 * B * S * D * D + 4 * B * S * D * D4),
            transcendentals=int(B * S * D4 + B * S),
            bytes_accessed=bytes_c),
    )(attn, x_f32, ln2, out_w, w1, b1, w2, b2)

    return out


# --------------------------------------------------------------------------
# Pure-JAX reference (same math, bf16 matmul operands mirrored), for verification.
# --------------------------------------------------------------------------
def reference_block(x, rotary_cos_sin, mode, params, n_heads):
    B, S, D = x.shape
    hd = D // n_heads
    half = hd // 2
    bf16, f32 = jnp.bfloat16, jnp.float32

    cos_full, sin_full = rotary_cos_sin
    cos = cos_full[0, :, 0, 0, :half].astype(f32)
    sin = sin_full[0, :, 0, 0, :half].astype(f32)

    def ln(v, w):
        mu = v.mean(-1, keepdims=True)
        var = ((v - mu) ** 2).mean(-1, keepdims=True)
        return (v - mu) / jnp.sqrt(var + 1e-5) * w

    def mm(a, b):
        return jnp.dot(a.astype(bf16), b.astype(bf16), preferred_element_type=f32)

    ln1 = params['ln1_ar'] if mode == 'ar' else params['ln1_diff']
    ln2 = params['ln2_ar'] if mode == 'ar' else params['ln2_diff']

    h = ln(x, ln1)
    qkv = mm(h, params['qkv_w'])                                   # (B,S,3D) f32
    q = qkv[..., :D].reshape(B, S, n_heads, hd)
    k = qkv[..., D:2 * D].reshape(B, S, n_heads, hd)
    v = qkv[..., 2 * D:].reshape(B, S, n_heads, hd)

    c = cos[None, :, None, :]
    s_ = sin[None, :, None, :]

    def rope(t):
        t1, t2 = t[..., :half], t[..., half:]
        return jnp.concatenate([t1 * c - t2 * s_, t2 * c + t1 * s_], axis=-1)

    q, k = rope(q), rope(k)
    qb, kb, vb = q.astype(bf16), k.astype(bf16), v.astype(bf16)

    scores = jnp.einsum('bshd,bthd->bhst', qb, kb,
                        preferred_element_type=f32) / jnp.sqrt(jnp.float32(hd))
    if mode == 'ar':
        mask = jnp.tril(jnp.ones((S, S), dtype=bool))
        scores = jnp.where(mask, scores, -1e30)
    p = jax.nn.softmax(scores, axis=-1)
    o = jnp.einsum('bhst,bthd->bshd', p.astype(bf16), vb,
                   preferred_element_type=f32).reshape(B, S, D)

    x1 = mm(o, params['out_w']) + x
    h2 = ln(x1, ln2)
    m = jax.nn.gelu(mm(h2, params['mlp_w1']) + params['mlp_b1'], approximate=True)
    return x1 + mm(m, params['mlp_w2']) + params['mlp_b2']


# --------------------------------------------------------------------------
# Main
# --------------------------------------------------------------------------
if __name__ == "__main__":
    B, S, D = 2, 8, 32
    n_heads = 2
    mlp_ratio = 4
    hd = D // n_heads

    key = jax.random.PRNGKey(0)
    keys = jax.random.split(key, 8)

    params = {
        'ln1_ar':   jnp.ones((1, D), jnp.float32),
        'ln1_diff': jnp.ones((1, D), jnp.float32),
        'ln2_ar':   jnp.ones((1, D), jnp.float32),
        'ln2_diff': jnp.ones((1, D), jnp.float32),
        'qkv_w':  0.02 * jax.random.normal(keys[0], (D, 3 * D), jnp.float32),
        'out_w':  0.02 * jax.random.normal(keys[1], (D, D), jnp.float32),
        'mlp_w1': 0.02 * jax.random.normal(keys[2], (D, mlp_ratio * D), jnp.float32),
        'mlp_b1': 0.02 * jax.random.normal(keys[3], (1, mlp_ratio * D), jnp.float32),
        'mlp_w2': 0.02 * jax.random.normal(keys[4], (mlp_ratio * D, D), jnp.float32),
        'mlp_b2': 0.02 * jax.random.normal(keys[5], (1, D), jnp.float32),
    }

    x = jax.random.normal(keys[6], (B, S, D), jnp.float32)

    # Rotary cos/sin as produced by the sdtt Rotary(head_dim) module: (1, S, 3, 1, hd)
    inv_freq = 1.0 / (10000.0 ** (jnp.arange(0, hd, 2, dtype=jnp.float32) / hd))
    t = jnp.arange(S, dtype=jnp.float32)
    freqs = jnp.einsum('i,j->ij', t, inv_freq)                 # (S, hd/2)
    emb = jnp.concatenate([freqs, freqs], axis=-1)             # (S, hd)
    cos_full = jnp.tile(jnp.cos(emb)[None, :, None, None, :], (1, 1, 3, 1, 1))
    sin_full = jnp.tile(jnp.sin(emb)[None, :, None, None, :], (1, 1, 3, 1, 1))
    # NOTE: rotary is applied only to q and k (identity on v), matching the
    # harness convention of forcing the third rotation slot to identity.
    cos_full = cos_full.at[:, :, 2].set(1.0)
    sin_full = sin_full.at[:, :, 2].set(0.0)
    rotary_cos_sin = (cos_full, sin_full)

    ok = True
    for mode in ('ar', 'diff'):
        out = transformer_block(x, rotary_cos_sin, mode, params, n_heads)
        out = jax.block_until_ready(out)
        ref = reference_block(x, rotary_cos_sin, mode, params, n_heads)
        ok &= bool(jnp.allclose(out, ref, atol=1e-2, rtol=1e-2))

    if ok:
        print("KERNEL_OK")
    else:
        print("MISMATCH")
</pallas_src>

<mosaic_0001>
module attributes {stable_mosaic.version = 11 : i64} {
  func.func @_ln_qkv_kernel(%arg0: i32, %arg1: i32, %arg2: memref<1x8x32xf32, #tpu.memory_space<vmem>>, %arg3: memref<1x32xf32, #tpu.memory_space<vmem>>, %arg4: memref<32x32xbf16, #tpu.memory_space<vmem>>, %arg5: memref<32x32xbf16, #tpu.memory_space<vmem>>, %arg6: memref<32x32xbf16, #tpu.memory_space<vmem>>, %arg7: memref<1x8x32xbf16, #tpu.memory_space<vmem>>, %arg8: memref<1x8x32xbf16, #tpu.memory_space<vmem>>, %arg9: memref<1x8x32xbf16, #tpu.memory_space<vmem>>) attributes {dimension_semantics = [#tpu.dimension_semantics<parallel>, #tpu.dimension_semantics<parallel>], iteration_bounds = array<i64: 2, 1>, scalar_prefetch = 0 : i64, scratch_operands = 0 : i64, tpu.core_type = #tpu.core_type<tc>, window_params = [{transform_indices = @transform_0, window_bounds = array<i64: 1, 8, 32>}, {pipeline_mode = #tpu.pipeline_mode<synchronous>, transform_indices = @transform_1, window_bounds = array<i64: 1, 32>}, {pipeline_mode = #tpu.pipeline_mode<synchronous>, transform_indices = @transform_2, window_bounds = array<i64: 32, 32>}, {pipeline_mode = #tpu.pipeline_mode<synchronous>, transform_indices = @transform_3, window_bounds = array<i64: 32, 32>}, {pipeline_mode = #tpu.pipeline_mode<synchronous>, transform_indices = @transform_4, window_bounds = array<i64: 32, 32>}, {transform_indices = @transform_5, window_bounds = array<i64: 1, 8, 32>}, {transform_indices = @transform_6, window_bounds = array<i64: 1, 8, 32>}, {transform_indices = @transform_7, window_bounds = array<i64: 1, 8, 32>}]} {
    %c0 = arith.constant 0 : index
    %c0_0 = arith.constant 0 : index
    %c0_1 = arith.constant 0 : index
    %0 = vector.load %arg2[%c0, %c0_0, %c0_1] : memref<1x8x32xf32, #tpu.memory_space<vmem>>, vector<1x8x32xf32>
    %1 = vector.shape_cast %0 : vector<1x8x32xf32> to vector<8x32xf32>
    %cst = arith.constant dense<0.000000e+00> : vector<8xf32>
    %2 = vector.multi_reduction <add>, %1, %cst [1] : vector<8x32xf32> to vector<8xf32>
    %3 = vector.shape_cast %2 : vector<8xf32> to vector<8x1xf32>
    %cst_2 = arith.constant 3.200000e+01 : f32
    %4 = vector.broadcast %cst_2 : f32 to vector<8x1xf32>
    %5 = arith.divf %3, %4 : vector<8x1xf32>
    %6 = vector.broadcast %5 : vector<8x1xf32> to vector<8x32xf32>
    %7 = arith.subf %1, %6 : vector<8x32xf32>
    %8 = arith.mulf %7, %7 : vector<8x32xf32>
    %cst_3 = arith.constant dense<0.000000e+00> : vector<8xf32>
    %9 = vector.multi_reduction <add>, %8, %cst_3 [1] : vector<8x32xf32> to vector<8xf32>
    %10 = vector.shape_cast %9 : vector<8xf32> to vector<8x1xf32>
    %cst_4 = arith.constant 3.200000e+01 : f32
    %11 = vector.broadcast %cst_4 : f32 to vector<8x1xf32>
    %12 = arith.divf %10, %11 : vector<8x1xf32>
    %13 = vector.broadcast %5 : vector<8x1xf32> to vector<8x32xf32>
    %14 = arith.subf %1, %13 : vector<8x32xf32>
    %cst_5 = arith.constant 9.99999974E-6 : f32
    %15 = vector.broadcast %cst_5 : f32 to vector<8x1xf32>
    %16 = arith.addf %12, %15 : vector<8x1xf32>
    %17 = math.rsqrt %16 : vector<8x1xf32>
    %18 = vector.broadcast %17 : vector<8x1xf32> to vector<8x32xf32>
    %19 = arith.mulf %14, %18 : vector<8x32xf32>
    %c0_6 = arith.constant 0 : index
    %c0_7 = arith.constant 0 : index
    %20 = vector.load %arg3[%c0_6, %c0_7] : memref<1x32xf32, #tpu.memory_space<vmem>>, vector<1x32xf32>
    %21 = vector.broadcast %20 : vector<1x32xf32> to vector<8x32xf32>
    %22 = arith.mulf %19, %21 : vector<8x32xf32>
    %23 = arith.truncf %22 : vector<8x32xf32> to vector<8x32xbf16>
    %c0_8 = arith.constant 0 : index
    %c0_9 = arith.constant 0 : index
    %24 = vector.load %arg4[%c0_8, %c0_9] : memref<32x32xbf16, #tpu.memory_space<vmem>>, vector<32x32xbf16>
    %cst_10 = arith.constant dense<0.000000e+00> : vector<8x32xf32>
    %25 = tpu.matmul %23, %24, %cst_10 {dimension_numbers = #tpu.dot_dimension_numbers<[1], [0], [0], [1], [0, 0, 1, 1], [], []>} : vector<8x32xbf16>, vector<32x32xbf16>, vector<8x32xf32> -> vector<8x32xf32>
    %26 = arith.truncf %25 : vector<8x32xf32> to vector<8x32xbf16>
    %c0_11 = arith.constant 0 : index
    %c0_12 = arith.constant 0 : index
    %c0_13 = arith.constant 0 : index
    %27 = vector.load %arg7[%c0_11, %c0_12, %c0_13] : memref<1x8x32xbf16, #tpu.memory_space<vmem>>, vector<1x8x32xbf16>
    %28 = vector.shape_cast %27 : vector<1x8x32xbf16> to vector<8x32xbf16>
    %29 = vector.shape_cast %26 : vector<8x32xbf16> to vector<1x8x32xbf16>
    tpu.vector_store %arg7[%c0_11, %c0_12, %c0_13], %29 {strides = array<i32>} : memref<1x8x32xbf16, #tpu.memory_space<vmem>>, vector<1x8x32xbf16>,
    %c0_14 = arith.constant 0 : index
    %c0_15 = arith.constant 0 : index
    %30 = vector.load %arg5[%c0_14, %c0_15] : memref<32x32xbf16, #tpu.memory_space<vmem>>, vector<32x32xbf16>
    %cst_16 = arith.constant dense<0.000000e+00> : vector<8x32xf32>
    %31 = tpu.matmul %23, %30, %cst_16 {dimension_numbers = #tpu.dot_dimension_numbers<[1], [0], [0], [1], [0, 0, 1, 1], [], []>} : vector<8x32xbf16>, vector<32x32xbf16>, vector<8x32xf32> -> vector<8x32xf32>
    %32 = arith.truncf %31 : vector<8x32xf32> to vector<8x32xbf16>
    %c0_17 = arith.constant 0 : index
    %c0_18 = arith.constant 0 : index
    %c0_19 = arith.constant 0 : index
    %33 = vector.load %arg8[%c0_17, %c0_18, %c0_19] : memref<1x8x32xbf16, #tpu.memory_space<vmem>>, vector<1x8x32xbf16>
    %34 = vector.shape_cast %33 : vector<1x8x32xbf16> to vector<8x32xbf16>
    %35 = vector.shape_cast %32 : vector<8x32xbf16> to vector<1x8x32xbf16>
    tpu.vector_store %arg8[%c0_17, %c0_18, %c0_19], %35 {strides = array<i32>} : memref<1x8x32xbf16, #tpu.memory_space<vmem>>, vector<1x8x32xbf16>,
    %c0_20 = arith.constant 0 : index
    %c0_21 = arith.constant 0 : index
    %36 = vector.load %arg6[%c0_20, %c0_21] : memref<32x32xbf16, #tpu.memory_space<vmem>>, vector<32x32xbf16>
    %cst_22 = arith.constant dense<0.000000e+00> : vector<8x32xf32>
    %37 = tpu.matmul %23, %36, %cst_22 {dimension_numbers = #tpu.dot_dimension_numbers<[1], [0], [0], [1], [0, 0, 1, 1], [], []>} : vector<8x32xbf16>, vector<32x32xbf16>, vector<8x32xf32> -> vector<8x32xf32>
    %38 = arith.truncf %37 : vector<8x32xf32> to vector<8x32xbf16>
    %c0_23 = arith.constant 0 : index
    %c0_24 = arith.constant 0 : index
    %c0_25 = arith.constant 0 : index
    %39 = vector.load %arg9[%c0_23, %c0_24, %c0_25] : memref<1x8x32xbf16, #tpu.memory_space<vmem>>, vector<1x8x32xbf16>
    %40 = vector.shape_cast %39 : vector<1x8x32xbf16> to vector<8x32xbf16>
    %41 = vector.shape_cast %38 : vector<8x32xbf16> to vector<1x8x32xbf16>
    tpu.vector_store %arg9[%c0_23, %c0_24, %c0_25], %41 {strides = array<i32>} : memref<1x8x32xbf16, #tpu.memory_space<vmem>>, vector<1x8x32xbf16>,
    return
  }
  func.func @transform_0(%arg0: i32, %arg1: i32) -> (i32, i32, i32) {
    %c0_i32 = arith.constant 0 : i32
    %c0_i32_0 = arith.constant 0 : i32
    return %arg0, %arg1, %c0_i32 : i32, i32, i32
  }
  func.func @transform_1(%arg0: i32, %arg1: i32) -> (i32, i32) {
    %c0_i32 = arith.constant 0 : i32
    %c0_i32_0 = arith.constant 0 : i32
    %c0_i32_1 = arith.constant 0 : i32
    return %c0_i32, %c0_i32_0 : i32, i32
  }
  func.func @transform_2(%arg0: i32, %arg1: i32) -> (i32, i32) {
    %c0_i32 = arith.constant 0 : i32
    %c0_i32_0 = arith.constant 0 : i32
    %c0_i32_1 = arith.constant 0 : i32
    return %c0_i32, %c0_i32_0 : i32, i32
  }
  func.func @transform_3(%arg0: i32, %arg1: i32) -> (i32, i32) {
    %c0_i32 = arith.constant 0 : i32
    %c0_i32_0 = arith.constant 0 : i32
    %c0_i32_1 = arith.constant 0 : i32
    return %c0_i32, %c0_i32_0 : i32, i32
  }
  func.func @transform_4(%arg0: i32, %arg1: i32) -> (i32, i32) {
    %c0_i32 = arith.constant 0 : i32
    %c0_i32_0 = arith.constant 0 : i32
    %c0_i32_1 = arith.constant 0 : i32
    return %c0_i32, %c0_i32_0 : i32, i32
  }
  func.func @transform_5(%arg0: i32, %arg1: i32) -> (i32, i32, i32) {
    %c0_i32 = arith.constant 0 : i32
    %c0_i32_0 = arith.constant 0 : i32
    return %arg0, %arg1, %c0_i32 : i32, i32, i32
  }
  func.func @transform_6(%arg0: i32, %arg1: i32) -> (i32, i32, i32) {
    %c0_i32 = arith.constant 0 : i32
    %c0_i32_0 = arith.constant 0 : i32
    return %arg0, %arg1, %c0_i32 : i32, i32, i32
  }
  func.func @transform_7(%arg0: i32, %arg1: i32) -> (i32, i32, i32) {
    %c0_i32 = arith.constant 0 : i32
    %c0_i32_0 = arith.constant 0 : i32
    return %arg0, %arg1, %c0_i32 : i32, i32, i32
  }
}

</mosaic_0001>

<llo_original>
// kernel: tpu_custom_call.1
$region0: #{tpu_custom_call.1}
  #allocation0 [shape = 'u32[]', space=smem, size = 0x4, offset = 0x4, fixed_abs, tag = 'smem constant byte address 0x4 - core index']
  #allocation1 [shape = 'u32[72,128]{1,0:T(1,128)}', space=vmem, size = 0x9000, scoped, tag = 'internal scratch']
  %s0 = inlined_call_operand.hbm [shape: f32[2,8,32], index: 0, kind: input, shape index: {}]
  %s1 = inlined_call_operand.hbm [shape: f32[1,32], index: 1, kind: input, shape index: {}]
  %s2 = inlined_call_operand.hbm [shape: bf16[32,32], index: 2, kind: input, shape index: {}]
  %s3 = inlined_call_operand.hbm [shape: bf16[32,32], index: 3, kind: input, shape index: {}]
  %s4 = inlined_call_operand.hbm [shape: bf16[32,32], index: 4, kind: input, shape index: {}]
  %s5 = inlined_call_operand.hbm [shape: bf16[2,8,32], index: 5, kind: output, shape index: {0}]
  %s6 = inlined_call_operand.hbm [shape: bf16[2,8,32], index: 6, kind: output, shape index: {1}]
  %s7 = inlined_call_operand.hbm [shape: bf16[2,8,32], index: 7, kind: output, shape index: {2}]
  %8 = xla_tuple %s5, %s6, %s7
  %s9 = sld [smem:[#allocation0]]
  $region89: #{tpu_custom_call.1} parent=0
    _
  %s11 = ssub.s32 1, %s9
  %s12 = scalar_select 0, %s11, %s9
  $region1: #{tpu_custom_call.1} parent=0
    #allocation2 [shape = 'u8[8192]{0}', space=vmem, size = 0x2000, scoped, tag = 'input window, operand 0']
    #allocation3 [shape = 's32[2]{0}', space=sflag, size = 0x8, scoped, tag = 'scoped memory for tpu_custom_call.1']
    #allocation4 [shape = 's32[2]{0}', space=sflag, size = 0x8, scoped, tag = 'scoped memory for tpu_custom_call.1']
    #allocation5 [shape = 'u8[512]{0}', space=vmem, size = 0x400, scoped, tag = 'input window, operand 1, single buffered']
    #allocation6 [shape = 's32[1]{0}', space=sflag, size = 0x4, scoped, tag = 'scoped memory for tpu_custom_call.1']
    #allocation7 [shape = 'u8[8192]{0}', space=vmem, size = 0x2000, scoped, tag = 'input window, operand 2, single buffered']
    #allocation8 [shape = 'u8[8192]{0}', space=vmem, size = 0x2000, scoped, tag = 'input window, operand 3, single buffered']
    #allocation9 [shape = 's32[1]{0}', space=sflag, size = 0x4, scoped, tag = 'scoped memory for tpu_custom_call.1']
    #allocation10 [shape = 'u8[8192]{0}', space=vmem, size = 0x2000, scoped, tag = 'input window, operand 4, single buffered']
    #allocation11 [shape = 'u8[4096]{0}', space=vmem, size = 0x1000, scoped, tag = 'output window, operand 0']
    #allocation12 [shape = 'u8[4096]{0}', space=vmem, size = 0x1000, scoped, tag = 'output window, operand 1']
    #allocation13 [shape = 's32[2]{0}', space=sflag, size = 0x8, scoped, tag = 'scoped memory for tpu_custom_call.1']
    #allocation14 [shape = 'u8[4096]{0}', space=vmem, size = 0x1000, scoped, tag = 'output window, operand 2']
    %13 = vsyncpa [#allocation3], 0
    %s14 = scalar_lea.sflag [#allocation3], 1
    %15 = vsyncpa %s14, 0
    %16 = vsyncpa [#allocation6], 0
    %17 = vsyncpa [#allocation9], 0
    %18 = vsyncpa [#allocation4], 0
    %s19 = scalar_lea.sflag [#allocation4], 1
    %20 = vsyncpa %s19, 0
    %21 = vsyncpa [#allocation13], 0
    %s22 = scalar_lea.sflag [#allocation13], 1
    %23 = vsyncpa %s22, 0
    loop: start=0, step=1, limit=4
    $region2: #{tpu_custom_call.1} parent=1 // loop_pre_header
      _
    $region3: #{tpu_custom_call.1} parent=1 // loop_header
      %s25 = sphi 0, %s29
      %p26 = scmp.ge.s32.totalorder %s25, 4
      %s32 = sphi 0, %s44
      %s33 = sphi 0, %s40
      %s34 = sphi 0, %s32
      %s35 = sphi 0, %s33
      %s36 = sphi 0, %s34
      %s37 = sphi 0, %s35
      %s49 = sphi 0, %s51
      %s52 = sphi 0, %s49
      %s53 = sphi 0, %s52
      %s69 = sphi 0, %s53
      %s73 = sphi 0, %s73
      %s75 = sphi 0, %s73
      %s76 = sphi 0, %s75
      %s90 = sphi 0, %s76
      %s94 = sphi 0, %s94
      %s96 = sphi 0, %s94
      %s97 = sphi 0, %s96
      %s111 = sphi 0, %s97
      %s115 = sphi 0, %s115
      %s117 = sphi 0, %s115
      %s118 = sphi 0, %s117
      %s132 = sphi 0, %s118
      %s136 = sphi 0, %s136
      %s138 = sphi 0, %s136
      %s139 = sphi 0, %s138
      %s153 = sphi 0, %s139
      %s161 = sphi 0, %s163
      %s164 = sphi 0, %s161
      %s165 = sphi 0, %s164
      %s181 = sphi 0, %s165
      %s189 = sphi 0, %s191
      %s192 = sphi 0, %s189
      %s193 = sphi 0, %s192
      %s209 = sphi 0, %s193
      %s217 = sphi 0, %s219
      %s220 = sphi 0, %s217
      %s221 = sphi 0, %s220
      %s237 = sphi 0, %s221
    $region4: #{tpu_custom_call.1} parent=1 // loop_header_branch
      %28 = sbr.rel (%p26) target = $region8
    $region5: #{tpu_custom_call.1} parent=1 // loop_body
      %s30 = ssub.s32 %s25, 1
      %s31 = ssub.s32 %s25, 2
      %s38 = sadd.s32 1, %s33
      %p39 = scmp.ge.s32.totalorder %s38, 1
      %s40 = scalar_select %p39, 0, %s38
      %s41 = sadd.s32 1, %s32
      %s42 = scalar_select %p39, %s41, %s32
      %p43 = scmp.ge.s32.totalorder %s42, 2
      %s44 = scalar_select %p43, 0, %s42
      %s45 = ssub.s32 %s32, %s44
      %s46 = ssub.s32 %s33, %s40
      %s47 = sor.u32 %s45, %s46
      %p48 = scmp.eq.s32.totalorder %s47, 0
      %s50 = sadd.s32 %s49, 1
      %s51 = scalar_select %p48, %s49, %s50
      %p54 = pneg %p48
      %p55 = scmp.eq.s32.totalorder %s25, 1
      %p56 = por %p54, %p55
      %p57 = scmp.ne.s32.totalorder %s49, %s52
      %p58 = scmp.eq.s32.totalorder %s25, 0
      %p59 = por %p57, %p58
      %p60 = scmp.ne.s32.totalorder %s49, %s52
      %p61 = scmp.eq.s32.totalorder %s30, 1
      %p62 = por %p60, %p61
      %p63 = scmp.ne.s32.totalorder %s52, %s53
      %p64 = scmp.eq.s32.totalorder %s30, 0
      %p65 = por %p63, %p64
      %p66 = scmp.ne.s32.totalorder %s52, %s53
      %p67 = scmp.eq.s32.totalorder %s31, 1
      %p68 = por %p66, %p67
      %p70 = scmp.ne.s32.totalorder %s53, %s69
      %p71 = scmp.eq.s32.totalorder %s31, 0
      %p72 = por %p70, %p71
      %s74 = sadd.s32 %s73, 1
      %p77 = scmp.eq.s32.totalorder %s25, 1
      %p78 = scmp.ne.s32.totalorder %s73, %s75
      %p79 = scmp.eq.s32.totalorder %s25, 0
      %p80 = por %p78, %p79
      %p81 = scmp.ne.s32.totalorder %s73, %s75
      %p82 = scmp.eq.s32.totalorder %s30, 1
      %p83 = por %p81, %p82
      %p84 = scmp.ne.s32.totalorder %s75, %s76
      %p85 = scmp.eq.s32.totalorder %s30, 0
      %p86 = por %p84, %p85
      %p87 = scmp.ne.s32.totalorder %s75, %s76
      %p88 = scmp.eq.s32.totalorder %s31, 1
      %p89 = por %p87, %p88
      %p91 = scmp.ne.s32.totalorder %s76, %s90
      %p92 = scmp.eq.s32.totalorder %s31, 0
      %p93 = por %p91, %p92
      %s95 = sadd.s32 %s94, 1
      %p98 = scmp.eq.s32.totalorder %s25, 1
      %p99 = scmp.ne.s32.totalorder %s94, %s96
      %p100 = scmp.eq.s32.totalorder %s25, 0
      %p101 = por %p99, %p100
      %p102 = scmp.ne.s32.totalorder %s94, %s96
      %p103 = scmp.eq.s32.totalorder %s30, 1
      %p104 = por %p102, %p103
      %p105 = scmp.ne.s32.totalorder %s96, %s97
      %p106 = scmp.eq.s32.totalorder %s30, 0
      %p107 = por %p105, %p106
      %p108 = scmp.ne.s32.totalorder %s96, %s97
      %p109 = scmp.eq.s32.totalorder %s31, 1
      %p110 = por %p108, %p109
      %p112 = scmp.ne.s32.totalorder %s97, %s111
      %p113 = scmp.eq.s32.totalorder %s31, 0
      %p114 = por %p112, %p113
      %s116 = sadd.s32 %s115, 1
      %p119 = scmp.eq.s32.totalorder %s25, 1
      %p120 = scmp.ne.s32.totalorder %s115, %s117
      %p121 = scmp.eq.s32.totalorder %s25, 0
      %p122 = por %p120, %p121
      %p123 = scmp.ne.s32.totalorder %s115, %s117
      %p124 = scmp.eq.s32.totalorder %s30, 1
      %p125 = por %p123, %p124
      %p126 = scmp.ne.s32.totalorder %s117, %s118
      %p127 = scmp.eq.s32.totalorder %s30, 0
      %p128 = por %p126, %p127
      %p129 = scmp.ne.s32.totalorder %s117, %s118
      %p130 = scmp.eq.s32.totalorder %s31, 1
      %p131 = por %p129, %p130
      %p133 = scmp.ne.s32.totalorder %s118, %s132
      %p134 = scmp.eq.s32.totalorder %s31, 0
      %p135 = por %p133, %p134
      %s137 = sadd.s32 %s136, 1
      %p140 = scmp.eq.s32.totalorder %s25, 1
      %p141 = scmp.ne.s32.totalorder %s136, %s138
      %p142 = scmp.eq.s32.totalorder %s25, 0
      %p143 = por %p141, %p142
      %p144 = scmp.ne.s32.totalorder %s136, %s138
      %p145 = scmp.eq.s32.totalorder %s30, 1
      %p146 = por %p144, %p145
      %p147 = scmp.ne.s32.totalorder %s138, %s139
      %p148 = scmp.eq.s32.totalorder %s30, 0
      %p149 = por %p147, %p148
      %p150 = scmp.ne.s32.totalorder %s138, %s139
      %p151 = scmp.eq.s32.totalorder %s31, 1
      %p152 = por %p150, %p151
      %p154 = scmp.ne.s32.totalorder %s139, %s153
      %p155 = scmp.eq.s32.totalorder %s31, 0
      %p156 = por %p154, %p155
      %s157 = ssub.s32 %s32, %s44
      %s158 = ssub.s32 %s33, %s40
      %s159 = sor.u32 %s157, %s158
      %p160 = scmp.eq.s32.totalorder %s159, 0
      %s162 = sadd.s32 %s161, 1
      %s163 = scalar_select %p160, %s161, %s162
      %p166 = pneg %p160
      %p167 = scmp.eq.s32.totalorder %s25, 1
      %p168 = por %p166, %p167
      %p169 = scmp.ne.s32.totalorder %s161, %s164
      %p170 = scmp.eq.s32.totalorder %s25, 0
      %p171 = por %p169, %p170
      %p172 = scmp.ne.s32.totalorder %s161, %s164
      %p173 = scmp.eq.s32.totalorder %s30, 1
      %p174 = por %p172, %p173
      %p175 = scmp.ne.s32.totalorder %s164, %s165
      %p176 = scmp.eq.s32.totalorder %s30, 0
      %p177 = por %p175, %p176
      %p178 = scmp.ne.s32.totalorder %s164, %s165
      %p179 = scmp.eq.s32.totalorder %s31, 1
      %p180 = por %p178, %p179
      %p182 = scmp.ne.s32.totalorder %s165, %s181
      %p183 = scmp.eq.s32.totalorder %s31, 0
      %p184 = por %p182, %p183
      %s185 = ssub.s32 %s32, %s44
      %s186 = ssub.s32 %s33, %s40
      %s187 = sor.u32 %s185, %s186
      %p188 = scmp.eq.s32.totalorder %s187, 0
      %s190 = sadd.s32 %s189, 1
      %s191 = scalar_select %p188, %s189, %s190
      %p194 = pneg %p188
      %p195 = scmp.eq.s32.totalorder %s25, 1
      %p196 = por %p194, %p195
      %p197 = scmp.ne.s32.totalorder %s189, %s192
      %p198 = scmp.eq.s32.totalorder %s25, 0
      %p199 = por %p197, %p198
      %p200 = scmp.ne.s32.totalorder %s189, %s192
      %p201 = scmp.eq.s32.totalorder %s30, 1
      %p202 = por %p200, %p201
      %p203 = scmp.ne.s32.totalorder %s192, %s193
      %p204 = scmp.eq.s32.totalorder %s30, 0
      %p205 = por %p203, %p204
      %p206 = scmp.ne.s32.totalorder %s192, %s193
      %p207 = scmp.eq.s32.totalorder %s31, 1
      %p208 = por %p206, %p207
      %p210 = scmp.ne.s32.totalorder %s193, %s209
      %p211 = scmp.eq.s32.totalorder %s31, 0
      %p212 = por %p210, %p211
      %s213 = ssub.s32 %s32, %s44
      %s214 = ssub.s32 %s33, %s40
      %s215 = sor.u32 %s213, %s214
      %p216 = scmp.eq.s32.totalorder %s215, 0
      %s218 = sadd.s32 %s217, 1
      %s219 = scalar_select %p216, %s217, %s218
      %p222 = pneg %p216
      %p223 = scmp.eq.s32.totalorder %s25, 1
      %p224 = por %p222, %p223
      %p225 = scmp.ne.s32.totalorder %s217, %s220
      %p226 = scmp.eq.s32.totalorder %s25, 0
      %p227 = por %p225, %p226
      %p228 = scmp.ne.s32.totalorder %s217, %s220
      %p229 = scmp.eq.s32.totalorder %s30, 1
      %p230 = por %p228, %p229
      %p231 = scmp.ne.s32.totalorder %s220, %s221
      %p232 = scmp.eq.s32.totalorder %s30, 0
      %p233 = por %p231, %p232
      %p234 = scmp.ne.s32.totalorder %s220, %s221
      %p235 = scmp.eq.s32.totalorder %s31, 1
      %p236 = por %p234, %p235
      %p238 = scmp.ne.s32.totalorder %s221, %s237
      %p239 = scmp.eq.s32.totalorder %s31, 0
      %p240 = por %p238, %p239
      %p241 = scmp.le.s32.totalorder 1, %s25
      %p242 = scmp.lt.s32.totalorder %s25, 3
      %p243 = pnand %p241, %p242
      %p244 = pneg %p243
      // Predicated region
      $region9: #{tpu_custom_call.1} parent=5 // pred_check
        _
      $region10: #{tpu_custom_call.1} parent=5 // pred_check_branch
        %246 = sbr.rel (%p243) target = $region12
      $region11: #{tpu_custom_call.1} parent=5 // pred_region
        %s247 = ssub.s32 %s25, 1
        // Predicated region
        $region13: #{tpu_custom_call.1} parent=11 // pred_check
          %p248 = pneg %p86
        $region14: #{tpu_custom_call.1} parent=11 // pred_check_branch
          %250 = sbr.rel (%p248) target = $region16
        $region15: #{tpu_custom_call.1} parent=11 // pred_region
          %252 = vsyncadd [#allocation6], 0
          %s254 = sshll.u32 %s1, 4
          %s255 = int_to_ptr.hbm [resolvable:$true] %s254
          %s256 = sshll.u32 [#allocation5], 4
          %s257 = int_to_ptr.vmem [resolvable:$true] %s256
          %259 = dma.hbm_to_vmem [thread:$0]  %s255, 16, %s257, [#allocation6]
        $region16: #{tpu_custom_call.1} parent=11 // pred_fallthru
          _
        // Predicated region
        $region17: #{tpu_custom_call.1} parent=11 // pred_check
          %p260 = pneg %p107
        $region18: #{tpu_custom_call.1} parent=11 // pred_check_branch
          %262 = sbr.rel (%p260) target = $region20
        $region19: #{tpu_custom_call.1} parent=11 // pred_region
          %264 = vsyncadd [#allocation6], 0
          %s265 = sshll.u32 %s2, 4
          %s266 = int_to_ptr.hbm [resolvable:$true] %s265
          %s267 = sshll.u32 [#allocation7], 4
          %s268 = int_to_ptr.vmem [resolvable:$true] %s267
          %273 = dma.hbm_to_vmem [thread:$0]  %s266, 256, %s268, [#allocation6], 64, 64, 4
        $region20: #{tpu_custom_call.1} parent=11 // pred_fallthru
          _
        // Predicated region
        $region21: #{tpu_custom_call.1} parent=11 // pred_check
          %p274 = pneg %p128
        $region22: #{tpu_custom_call.1} parent=11 // pred_check_branch
          %276 = sbr.rel (%p274) target = $region24
        $region23: #{tpu_custom_call.1} parent=11 // pred_region
          %278 = vsyncadd [#allocation9], 0
          %s279 = sshll.u32 %s3, 4
          %s280 = int_to_ptr.hbm [resolvable:$true] %s279
          %s281 = sshll.u32 [#allocation8], 4
          %s282 = int_to_ptr.vmem [resolvable:$true] %s281
          %287 = dma.hbm_to_vmem [thread:$0]  %s280, 256, %s282, [#allocation9], 64, 64, 4
        $region24: #{tpu_custom_call.1} parent=11 // pred_fallthru
          _
        // Predicated region
        $region25: #{tpu_custom_call.1} parent=11 // pred_check
          %p288 = pneg %p149
        $region26: #{tpu_custom_call.1} parent=11 // pred_check_branch
          %290 = sbr.rel (%p288) target = $region28
        $region27: #{tpu_custom_call.1} parent=11 // pred_region
          %292 = vsyncadd [#allocation9], 0
          %s293 = sshll.u32 %s4, 4
          %s294 = int_to_ptr.hbm [resolvable:$true] %s293
          %s295 = sshll.u32 [#allocation10], 4
          %s296 = int_to_ptr.vmem [resolvable:$true] %s295
          %301 = dma.hbm_to_vmem [thread:$0]  %s294, 256, %s296, [#allocation9], 64, 64, 4
        $region28: #{tpu_custom_call.1} parent=11 // pred_fallthru
          _
      $region12: #{tpu_custom_call.1} parent=5 // pred_fallthru
        _
      %p302 = scmp.lt.s32.totalorder %s25, 2
      // Predicated region
      $region29: #{tpu_custom_call.1} parent=5 // pred_check
        %p303 = pneg %p302
      $region30: #{tpu_custom_call.1} parent=5 // pred_check_branch
        %305 = sbr.rel (%p303) target = $region32
      $region31: #{tpu_custom_call.1} parent=5 // pred_region
        // Predicated region
        $region33: #{tpu_custom_call.1} parent=31 // pred_check
          %p306 = pneg %p59
        $region34: #{tpu_custom_call.1} parent=31 // pred_check_branch
          %308 = sbr.rel (%p306) target = $region36
        $region35: #{tpu_custom_call.1} parent=31 // pred_region
          %s309 = sand.u32 %s49, 1
          %s310 = scalar_lea.sflag [#allocation3], %s309
          %s311 = sand.u32 %s49, 1
          %s312 = smul.addr %s311, 8
          %s313 = scalar_lea.vmem [#allocation2], %s312
          %315 = vsyncadd %s310, 0
          %s316 = sadd.s32 %s33, %s32
          %s317 = smul.addr %s316, 8
          %s318 = scalar_lea.hbm %s0, %s317
          %s320 = sshll.u32 %s318, 4
          %s321 = int_to_ptr.hbm [resolvable:$true] %s320
          %s322 = sshll.u32 %s313, 4
          %s323 = int_to_ptr.vmem [resolvable:$true] %s322
          %325 = dma.hbm_to_vmem [thread:$0]  %s321, 128, %s323, %s310
        $region36: #{tpu_custom_call.1} parent=31 // pred_fallthru
          _
      $region32: #{tpu_custom_call.1} parent=5 // pred_fallthru
        _
      %p326 = scmp.le.s32.totalorder 1, %s25
      %p327 = scmp.lt.s32.totalorder %s25, 3
      %p328 = pnand %p326, %p327
      %p329 = pneg %p328
      // Predicated region
      $region37: #{tpu_custom_call.1} parent=5 // pred_check
        _
      $region38: #{tpu_custom_call.1} parent=5 // pred_check_branch
        %331 = sbr.rel (%p328) target = $region40
      $region39: #{tpu_custom_call.1} parent=5 // pred_region
        %s332 = ssub.s32 %s25, 1
        %s333 = sand.u32 %s52, 1
        %s334 = scalar_lea.sflag [#allocation3], %s333
        %s335 = sand.u32 %s52, 1
        %s336 = smul.addr %s335, 8
        %s337 = scalar_lea.vmem [#allocation2], %s336
        // Predicated region
        $region41: #{tpu_custom_call.1} parent=39 // pred_check
          %p338 = pneg %p65
        $region42: #{tpu_custom_call.1} parent=39 // pred_check_branch
          %340 = sbr.rel (%p338) target = $region44
        $region43: #{tpu_custom_call.1} parent=39 // pred_region
          %342 = dma.done %s334, 128
        $region44: #{tpu_custom_call.1} parent=39 // pred_fallthru
          _
        // Predicated region
        $region45: #{tpu_custom_call.1} parent=39 // pred_check
          %p343 = pneg %p86
        $region46: #{tpu_custom_call.1} parent=39 // pred_check_branch
          %345 = sbr.rel (%p343) target = $region48
        $region47: #{tpu_custom_call.1} parent=39 // pred_region
          %347 = dma.done [#allocation6], 16
        $region48: #{tpu_custom_call.1} parent=39 // pred_fallthru
          _
        // Predicated region
        $region49: #{tpu_custom_call.1} parent=39 // pred_check
          %p348 = pneg %p107
        $region50: #{tpu_custom_call.1} parent=39 // pred_check_branch
          %350 = sbr.rel (%p348) target = $region52
        $region51: #{tpu_custom_call.1} parent=39 // pred_region
          %352 = dma.done [#allocation6], 256
        $region52: #{tpu_custom_call.1} parent=39 // pred_fallthru
          _
        // Predicated region
        $region53: #{tpu_custom_call.1} parent=39 // pred_check
          %p353 = pneg %p128
        $region54: #{tpu_custom_call.1} parent=39 // pred_check_branch
          %355 = sbr.rel (%p353) target = $region56
        $region55: #{tpu_custom_call.1} parent=39 // pred_region
          %357 = dma.done [#allocation9], 256
        $region56: #{tpu_custom_call.1} parent=39 // pred_fallthru
          _
        // Predicated region
        $region57: #{tpu_custom_call.1} parent=39 // pred_check
          %p358 = pneg %p149
        $region58: #{tpu_custom_call.1} parent=39 // pred_check_branch
          %360 = sbr.rel (%p358) target = $region60
        $region59: #{tpu_custom_call.1} parent=39 // pred_region
          %362 = dma.done [#allocation9], 256
        $region60: #{tpu_custom_call.1} parent=39 // pred_fallthru
          _
        %s363 = sand.u32 %s52, 1
        %s364 = scalar_lea.sflag [#allocation3], %s363
        %s365 = sand.u32 %s52, 1
        %s366 = smul.addr %s365, 8
        %s367 = scalar_lea.vmem [#allocation2], %s366
        %p368 = pneg %p65
        %p369 = pneg %p62
        %p370 = pneg %p86
        %p371 = pneg %p83
        %p372 = pneg %p107
        %p373 = pneg %p104
        %p374 = pneg %p128
        %p375 = pneg %p125
        %p376 = pneg %p149
        %p377 = pneg %p146
        %p378 = pneg %p177
        %p379 = pneg %p174
        %s380 = sand.u32 %s164, 1
        %s381 = scalar_lea.sflag [#allocation4], %s380
        %s382 = sand.u32 %s164, 1
        %s383 = smul.addr %s382, 4
        %s384 = scalar_lea.vmem [#allocation11], %s383
        %p385 = pneg %p205
        %p386 = pneg %p202
        %s387 = sand.u32 %s30, 1
        %s388 = scalar_lea.sflag [#allocation13], %s387
        %s389 = sand.u32 %s192, 1
        %s390 = smul.addr %s389, 4
        %s391 = scalar_lea.vmem [#allocation12], %s390
        %p392 = pneg %p233
        %p393 = pneg %p230
        %s394 = sand.u32 %s30, 1
        %s395 = scalar_lea.sflag [#allocation13], %s394
        %s396 = sand.u32 %s220, 1
        %s397 = smul.addr %s396, 4
        %s398 = scalar_lea.vmem [#allocation14], %s397
        %v400 = vld [vmem:[%s337] sm:$0xff]
        %vm401 = vcmask 261120
        %v402 = vsel %vm401, %v400, 0.0
        %403 = vadd.xlane.f32.xlu0 %v402
        %v404 = vpop.xlane.xlu0 %403
        %v405 = vrcp.pop 32.0
        %v406 = vmul.f32 32.0, %v405
        %v407 = vsub.f32 1.0, %v406
        %v408 = vmul.f32 %v405, %v407
        %v409 = vadd.f32 %v405, %v408
        %vm410 = vweird.f32 %v405
        %v411 = vsel %vm410, %v405, %v409
        %v412 = vmul.f32 %v404, %v411
        %v413 = vsub.f32 %v400, %v412
        %v414 = vmul.f32 %v413, %v413
        %v415 = vsel %vm401, %v414, 0.0
        %416 = vadd.xlane.f32.xlu0 %v415
        %v417 = vpop.xlane.xlu0 %416
        %v418 = vmul.f32 %v417, %v411
        %v419 = vadd.f32 %v418, 1e-05
        %v420 = vrsqrt.pop %v419
        %v421 = vmul.f32 %v420, %v419
        %v422 = vmul.f32 %v421, %v420
        %v423 = vmul.f32 0.5, %v422
        %v424 = vsub.f32 1.5, %v423
        %v425 = vmul.f32 %v420, %v424
        %vm426 = vweird.f32 %v419
        %vm427 = vweird.f32 %v420
        %vm428 = vmor %vm426, %vm427
        %v429 = vsel %vm428, %v420, %v425
        %v430 = vmul.f32 %v413, %v429
        %v431 = vld [vmem:[#allocation5] sm:$0x1]
        %v433 = vperm.slane %v431, 0
        %v435 = vmul.f32 %v430, %v433
        %v436 = vpack.c.bf16 %v435, %v435
        %v437 = vld [vmem:[#allocation7] sm:$0xf]
        %v438 = vld [vmem:[#allocation7 + $0x4] sm:$0xf]
        %v439 = vld [vmem:[#allocation7 + $0x8] sm:$0xf]
        %v440 = vld [vmem:[#allocation7 + $0xc] sm:$0xf]
        %v445 = vunpack.c.l.b16 %v437
        %v446 = vunpack.c.l.b16 %v438
        %v447 = vunpack.c.l.b16 %v439
        %v448 = vunpack.c.l.b16 %v440
        %v449 = vpack.c.b16 %v446, %v445
        %v450 = vpack.c.b16 %v448, %v447
        %v454 = vsel %vm401, %v436, 0
        %456 = vmatpush.bf16.msra.mxu0 0
        %457 = vmatpush.bf16.msra.mxu0 0
        %458 = vmatpush.bf16.msra.mxu0 0
        %459 = vmatpush.bf16.msra.mxu0 0
        %460 = vmatpush.bf16.msra.mxu0 0
        %461 = vmatpush.bf16.msra.mxu0 0
        %462 = vmatpush.bf16.msra.mxu0 %v450
        %463 = vmatpush.bf16.msra.mxu0 %v449
        %464 = vmatmul.bf16.gmra.mxu0 %v454
        %v465 = vpop.f32.mrf.mxu0
        %v466 = vadd.f32 0.0, %v465
        %v467 = vpop.f32.mrf.mxu0
        %468 = vdwg.mxu0
        %v469 = vpack.c.bf16 %v466, %v466
        %vm470 = vcmask 257024
        %471 = vst.msk [vmem:[%s384] sm:$0xf] %vm470, %v469
        %v472 = vld [vmem:[#allocation8] sm:$0xf]
        %v473 = vld [vmem:[#allocation8 + $0x4] sm:$0xf]
        %v474 = vld [vmem:[#allocation8 + $0x8] sm:$0xf]
        %v475 = vld [vmem:[#allocation8 + $0xc] sm:$0xf]
        %v480 = vunpack.c.l.b16 %v472
        %v481 = vunpack.c.l.b16 %v473
        %v482 = vunpack.c.l.b16 %v474
        %v483 = vunpack.c.l.b16 %v475
        %v484 = vpack.c.b16 %v481, %v480
        %v485 = vpack.c.b16 %v483, %v482
        %488 = vmatpush.bf16.msra.mxu0 0
        %489 = vmatpush.bf16.msra.mxu0 0
        %490 = vmatpush.bf16.msra.mxu0 0
        %491 = vmatpush.bf16.msra.mxu0 0
        %492 = vmatpush.bf16.msra.mxu0 0
        %493 = vmatpush.bf16.msra.mxu0 0
        %494 = vmatpush.bf16.msra.mxu0 %v485
        %495 = vmatpush.bf16.msra.mxu0 %v484
        %496 = vmatmul.bf16.gmra.mxu0 %v454
        %v497 = vpop.f32.mrf.mxu0
        %v498 = vadd.f32 0.0, %v497
        %v499 = vpop.f32.mrf.mxu0
        %500 = vdwg.mxu0
        %v501 = vpack.c.bf16 %v498, %v498
        %502 = vst.msk [vmem:[%s391] sm:$0xf] %vm470, %v501
        %v503 = vld [vmem:[#allocation10] sm:$0xf]
        %v504 = vld [vmem:[#allocation10 + $0x4] sm:$0xf]
        %v505 = vld [vmem:[#allocation10 + $0x8] sm:$0xf]
        %v506 = vld [vmem:[#allocation10 + $0xc] sm:$0xf]
        %v511 = vunpack.c.l.b16 %v503
        %v512 = vunpack.c.l.b16 %v504
        %v513 = vunpack.c.l.b16 %v505
        %v514 = vunpack.c.l.b16 %v506
        %v515 = vpack.c.b16 %v512, %v511
        %v516 = vpack.c.b16 %v514, %v513
        %519 = vmatpush.bf16.msra.mxu0 0
        %520 = vmatpush.bf16.msra.mxu0 0
        %521 = vmatpush.bf16.msra.mxu0 0
        %522 = vmatpush.bf16.msra.mxu0 0
        %523 = vmatpush.bf16.msra.mxu0 0
        %524 = vmatpush.bf16.msra.mxu0 0
        %525 = vmatpush.bf16.msra.mxu0 %v516
        %526 = vmatpush.bf16.msra.mxu0 %v515
        %527 = vmatmul.bf16.gmra.mxu0 %v454
        %v528 = vpop.f32.mrf.mxu0
        %v529 = vadd.f32 0.0, %v528
        %v530 = vpop.f32.mrf.mxu0
        %531 = vdwg.mxu0
        %v532 = vpack.c.bf16 %v529, %v529
        %533 = vst.msk [vmem:[%s398] sm:$0xf] %vm470, %v532
        %s534 = sand.u32 %s164, 1
        %s535 = scalar_lea.sflag [#allocation4], %s534
        %s536 = sand.u32 %s164, 1
        %s537 = smul.addr %s536, 4
        %s538 = scalar_lea.vmem [#allocation11], %s537
        %s539 = sand.u32 %s30, 1
        %s540 = scalar_lea.sflag [#allocation13], %s539
        %s541 = sand.u32 %s192, 1
        %s542 = smul.addr %s541, 4
        %s543 = scalar_lea.vmem [#allocation12], %s542
        %s544 = sand.u32 %s30, 1
        %s545 = scalar_lea.sflag [#allocation13], %s544
        %s546 = sand.u32 %s220, 1
        %s547 = smul.addr %s546, 4
        %s548 = scalar_lea.vmem [#allocation14], %s547
        // Predicated region
        $region61: #{tpu_custom_call.1} parent=39 // pred_check
          %p549 = pneg %p174
        $region62: #{tpu_custom_call.1} parent=39 // pred_check_branch
          %551 = sbr.rel (%p549) target = $region64
        $region63: #{tpu_custom_call.1} parent=39 // pred_region
          %553 = vsyncadd %s535, 0
          %s554 = sadd.s32 %s35, %s34
          %s555 = smul.addr %s554, 4
          %s556 = scalar_lea.hbm %s5, %s555
          %s558 = sshll.u32 %s538, 4
          %s559 = int_to_ptr.vmem [resolvable:$true] %s558
          %s560 = sshll.u32 %s556, 4
          %s561 = int_to_ptr.hbm [resolvable:$true] %s560
          %563 = dma.vmem_to_hbm [thread:$0]  %s559, 64, %s561, %s535
        $region64: #{tpu_custom_call.1} parent=39 // pred_fallthru
          _
        // Predicated region
        $region65: #{tpu_custom_call.1} parent=39 // pred_check
          %p564 = pneg %p202
        $region66: #{tpu_custom_call.1} parent=39 // pred_check_branch
          %566 = sbr.rel (%p564) target = $region68
        $region67: #{tpu_custom_call.1} parent=39 // pred_region
          %568 = vsyncadd %s540, 0
          %s569 = sadd.s32 %s35, %s34
          %s570 = smul.addr %s569, 4
          %s571 = scalar_lea.hbm %s6, %s570
          %s573 = sshll.u32 %s543, 4
          %s574 = int_to_ptr.vmem [resolvable:$true] %s573
          %s575 = sshll.u32 %s571, 4
          %s576 = int_to_ptr.hbm [resolvable:$true] %s575
          %578 = dma.vmem_to_hbm [thread:$0]  %s574, 64, %s576, %s540
        $region68: #{tpu_custom_call.1} parent=39 // pred_fallthru
          _
        // Predicated region
        $region69: #{tpu_custom_call.1} parent=39 // pred_check
          %p579 = pneg %p230
        $region70: #{tpu_custom_call.1} parent=39 // pred_check_branch
          %581 = sbr.rel (%p579) target = $region72
        $region71: #{tpu_custom_call.1} parent=39 // pred_region
          %583 = vsyncadd %s545, 0
          %s584 = sadd.s32 %s35, %s34
          %s585 = smul.addr %s584, 4
          %s586 = scalar_lea.hbm %s7, %s585
          %s588 = sshll.u32 %s548, 4
          %s589 = int_to_ptr.vmem [resolvable:$true] %s588
          %s590 = sshll.u32 %s586, 4
          %s591 = int_to_ptr.hbm [resolvable:$true] %s590
          %593 = dma.vmem_to_hbm [thread:$0]  %s589, 64, %s591, %s545
        $region72: #{tpu_custom_call.1} parent=39 // pred_fallthru
          _
      $region40: #{tpu_custom_call.1} parent=5 // pred_fallthru
        _
      %p594 = scmp.le.s32.totalorder 2, %s25
      // Predicated region
      $region73: #{tpu_custom_call.1} parent=5 // pred_check
        %p595 = pneg %p594
      $region74: #{tpu_custom_call.1} parent=5 // pred_check_branch
        %597 = sbr.rel (%p595) target = $region76
      $region75: #{tpu_custom_call.1} parent=5 // pred_region
        %s598 = ssub.s32 %s25, 2
        // Predicated region
        $region77: #{tpu_custom_call.1} parent=75 // pred_check
          %p599 = pneg %p180
        $region78: #{tpu_custom_call.1} parent=75 // pred_check_branch
          %601 = sbr.rel (%p599) target = $region80
        $region79: #{tpu_custom_call.1} parent=75 // pred_region
          %s602 = sand.u32 %s165, 1
          %s603 = scalar_lea.sflag [#allocation4], %s602
          %s604 = sand.u32 %s165, 1
          %s605 = smul.addr %s604, 4
          %s606 = scalar_lea.vmem [#allocation11], %s605
          %608 = dma.done %s603, 64
        $region80: #{tpu_custom_call.1} parent=75 // pred_fallthru
          _
        // Predicated region
        $region81: #{tpu_custom_call.1} parent=75 // pred_check
          %p609 = pneg %p208
        $region82: #{tpu_custom_call.1} parent=75 // pred_check_branch
          %611 = sbr.rel (%p609) target = $region84
        $region83: #{tpu_custom_call.1} parent=75 // pred_region
          %s612 = sand.u32 %s31, 1
          %s613 = scalar_lea.sflag [#allocation13], %s612
          %s614 = sand.u32 %s193, 1
          %s615 = smul.addr %s614, 4
          %s616 = scalar_lea.vmem [#allocation12], %s615
          %618 = dma.done %s613, 64
        $region84: #{tpu_custom_call.1} parent=75 // pred_fallthru
          _
        // Predicated region
        $region85: #{tpu_custom_call.1} parent=75 // pred_check
          %p619 = pneg %p236
        $region86: #{tpu_custom_call.1} parent=75 // pred_check_branch
          %621 = sbr.rel (%p619) target = $region88
        $region87: #{tpu_custom_call.1} parent=75 // pred_region
          %s622 = sand.u32 %s31, 1
          %s623 = scalar_lea.sflag [#allocation13], %s622
          %s624 = sand.u32 %s221, 1
          %s625 = smul.addr %s624, 4
          %s626 = scalar_lea.vmem [#allocation14], %s625
          %628 = dma.done %s623, 64
        $region88: #{tpu_custom_call.1} parent=75 // pred_fallthru
          _
      $region76: #{tpu_custom_call.1} parent=5 // pred_fallthru
        _
    $region6: #{tpu_custom_call.1} parent=1 // loop_footer
      %s29 = sadd.s32 1, %s25
    $region7: #{tpu_custom_call.1} parent=1 // loop_footer_branch
      %24 = sbr.rel target = $region3
    $region8: #{tpu_custom_call.1} parent=1 // loop_exit
      _
    %629 = vsyncpa [#allocation3], 1
    %s630 = scalar_lea.sflag [#allocation3], 1
    %631 = vsyncpa %s630, 1
    %632 = vsyncpa [#allocation6], 1
    %633 = vsyncpa [#allocation9], 1
    %634 = vsyncpa [#allocation4], 1
    %s635 = scalar_lea.sflag [#allocation4], 1
    %636 = vsyncpa %s635, 1
    %637 = vsyncpa [#allocation13], 1
    %s638 = scalar_lea.sflag [#allocation13], 1
    %639 = vsyncpa %s638, 1

</llo_original>
